<compile_context>
chip_gen: v7x
topology: tpu7x:2x2x1
jax: 0.10.0
libtpu: 0.0.40
codegen_flags: <defaults>
</compile_context>

<pallas_src>
import functools

import jax
import jax.numpy as jnp
import numpy as np
from jax import lax
from jax.experimental import pallas as pl
from jax.experimental.pallas import tpu as pltpu

_LANE = 128
_SUB = 8


def _rup(x, m):
    return (x + m - 1) // m * m


def _mlp_fused_kernel(mid_ref, uid_ref,                     # scalar prefetch (SMEM)
                      mtbl_ref, utbl_ref, genre_ref,        # VMEM inputs
                      w1m_ref, w1u_ref, w1g_ref, b1_ref,
                      w2_ref, b2_ref, w3_ref, b3_ref,
                      o_ref,                                # (TILE_B, 128) lane-dense
                      me_sc, ue_sc):                        # VMEM scratch
    i = pl.program_id(0)
    tile_b = o_ref.shape[0]
    base = i * tile_b

    # Fused embedding lookup: gather the rows of this batch tile into VMEM
    # scratch. Ids are scalars in SMEM (scalar prefetch), table rows are
    # dynamic sublane slices of the VMEM-resident tables.
    def gather(r, carry):
        m = mid_ref[base + r]
        u = uid_ref[base + r]
        me_sc[pl.ds(r, 1), :] = mtbl_ref[pl.ds(m, 1), :]
        ue_sc[pl.ds(r, 1), :] = utbl_ref[pl.ds(u, 1), :]
        return carry

    lax.fori_loop(0, tile_b, gather, 0, unroll=(tile_b <= 32))

    # fc1 as three partial K-chunks (movie / user / genre) -- equivalent to
    # concat(x) @ w1, without ever materializing the concatenated activation.
    h1 = (
        jnp.dot(me_sc[...], w1m_ref[...], preferred_element_type=jnp.float32)
        + jnp.dot(ue_sc[...], w1u_ref[...], preferred_element_type=jnp.float32)
        + jnp.dot(genre_ref[...], w1g_ref[...], preferred_element_type=jnp.float32)
        + b1_ref[...]
    )
    h1 = jnp.maximum(h1, 0.0)

    h2 = jnp.maximum(
        jnp.dot(h1, w2_ref[...], preferred_element_type=jnp.float32) + b2_ref[...],
        0.0,
    )

    # fc3: w3/b3 are zero-padded to 128 output lanes -> lane-dense unmasked
    # store (only lane 0 is meaningful; the wrapper slices it out).
    o_ref[...] = (
        jnp.dot(h2, w3_ref[...], preferred_element_type=jnp.float32) + b3_ref[...]
    )


@jax.jit
def movielens_forward(packed, movie_id, user_id, genre_id):
    """Fused MovieLensNet forward. Returns (B, 1) float32."""
    B = movie_id.shape[0]
    e_pad = packed["movie_table"].shape[1]
    g_pad = packed["w1g"].shape[0]
    out_pad = packed["w3"].shape[1]

    # Batch tiling: >=256-row tiles fill the 256-wide MXU on v6e/v7x; for the
    # toy batch this collapses to a single grid step.
    tile_b = min(256, _rup(B, _SUB))
    b_pad = _rup(B, tile_b)
    n_steps = b_pad // tile_b

    mids = jnp.zeros((b_pad,), jnp.int32).at[:B].set(movie_id.astype(jnp.int32))
    uids = jnp.zeros((b_pad,), jnp.int32).at[:B].set(user_id.astype(jnp.int32))
    genre = jnp.zeros((b_pad, g_pad), jnp.float32)
    genre = genre.at[:B, : genre_id.shape[1]].set(genre_id.astype(jnp.float32))

    def full(shape):
        # Full-array block, pinned to block index 0 on every grid step so the
        # tables / weights stay VMEM-resident across the batch loop.
        return pl.BlockSpec(shape, lambda i, mid, uid, _s=shape: (0,) * len(_s))

    grid_spec = pltpu.PrefetchScalarGridSpec(
        num_scalar_prefetch=2,
        grid=(n_steps,),
        in_specs=[
            full(packed["movie_table"].shape),
            full(packed["user_table"].shape),
            pl.BlockSpec((tile_b, g_pad), lambda i, mid, uid: (i, 0)),
            full(packed["w1m"].shape),
            full(packed["w1u"].shape),
            full(packed["w1g"].shape),
            full(packed["b1"].shape),
            full(packed["w2"].shape),
            full(packed["b2"].shape),
            full(packed["w3"].shape),
            full(packed["b3"].shape),
        ],
        out_specs=pl.BlockSpec((tile_b, out_pad), lambda i, mid, uid: (i, 0)),
        scratch_shapes=[
            pltpu.VMEM((tile_b, e_pad), jnp.float32),
            pltpu.VMEM((tile_b, e_pad), jnp.float32),
        ],
    )

    out = pl.pallas_call(
        _mlp_fused_kernel,
        out_shape=jax.ShapeDtypeStruct((b_pad, out_pad), jnp.float32),
        grid_spec=grid_spec,
        compiler_params=pltpu.CompilerParams(
            # Batch tiles are independent: shard across both TCs on v7x.
            dimension_semantics=("parallel",),
        ),
    )(
        mids, uids,
        packed["movie_table"], packed["user_table"], genre,
        packed["w1m"], packed["w1u"], packed["w1g"], packed["b1"],
        packed["w2"], packed["b2"], packed["w3"], packed["b3"],
    )

    return out[:B, :1]


def init_params(key, num_movies, num_users, num_genres, embedding_size, hidden_dim):
    """Raw (unpadded) parameters, matching torch defaults in spirit."""
    ks = jax.random.split(key, 5)
    d_in = embedding_size * 2 + num_genres

    def lin(k, fan_in, fan_out):
        kw, kb = jax.random.split(k)
        bound = 1.0 / np.sqrt(fan_in)
        w = jax.random.uniform(kw, (fan_in, fan_out), jnp.float32, -bound, bound)
        b = jax.random.uniform(kb, (1, fan_out), jnp.float32, -bound, bound)
        return w, b

    movie_tbl = jax.random.normal(ks[0], (num_movies, embedding_size), jnp.float32)
    user_tbl = jax.random.normal(ks[1], (num_users, embedding_size), jnp.float32)
    w1, b1 = lin(ks[2], d_in, hidden_dim)
    w2, b2 = lin(ks[3], hidden_dim, 64)
    w3, b3 = lin(ks[4], 64, 1)
    return dict(movie_embedding=movie_tbl, user_embedding=user_tbl,
                w1=w1, b1=b1, w2=w2, b2=b2, w3=w3, b3=b3)


def pack_params(params, embedding_size, num_genres):
    """Offline repack: zero-pad every lane dim to 128 / sublane dim to 8 and
    split w1 row-wise into its movie / user / genre K-chunks."""
    E, G = embedding_size, num_genres
    H1 = params["w1"].shape[1]
    H2 = params["w2"].shape[1]
    e_pad, g_pad = _rup(E, _LANE), _rup(G, _LANE)
    h1_pad, h2_pad, out_pad = _rup(H1, _LANE), _rup(H2, _LANE), _LANE

    def pad2(a, rows, cols):
        out = jnp.zeros((rows, cols), a.dtype)
        return out.at[: a.shape[0], : a.shape[1]].set(a)

    w1 = params["w1"]
    mtbl = params["movie_embedding"]
    utbl = params["user_embedding"]
    # TODO(synk): for production-scale embedding tables keep them in HBM
    # (pl.BlockSpec(memory_space=pl.ANY)) and row-DMA with make_async_copy
    # instead of holding the padded tables in VMEM.
    return dict(
        movie_table=pad2(mtbl, _rup(mtbl.shape[0], _SUB), e_pad),
        user_table=pad2(utbl, _rup(utbl.shape[0], _SUB), e_pad),
        w1m=pad2(w1[:E], e_pad, h1_pad),
        w1u=pad2(w1[E:2 * E], e_pad, h1_pad),
        w1g=pad2(w1[2 * E:], g_pad, h1_pad),
        b1=pad2(params["b1"], 1, h1_pad),
        w2=pad2(params["w2"], h1_pad, h2_pad),
        b2=pad2(params["b2"], 1, h2_pad),
        w3=pad2(params["w3"], h2_pad, out_pad),
        b3=pad2(params["b3"], 1, out_pad),
    )


def movielens_forward_ref(params, movie_id, user_id, genre_id):
    """Pure-JAX reference matching the PyTorch module semantics."""
    me = params["movie_embedding"][movie_id]
    ue = params["user_embedding"][user_id]
    x = jnp.concatenate([me, ue, genre_id.astype(jnp.float32)], axis=1)
    h1 = jnp.maximum(x @ params["w1"] + params["b1"], 0.0)
    h2 = jnp.maximum(h1 @ params["w2"] + params["b2"], 0.0)
    return h2 @ params["w3"] + params["b3"]


if __name__ == "__main__":
    num_movies = 100
    num_users = 50
    num_genres = 18
    embedding_size = 16
    hidden_dim = 32
    batch = 8

    key = jax.random.PRNGKey(0)
    kp, km, ku, kg = jax.random.split(key, 4)

    params = init_params(kp, num_movies, num_users, num_genres,
                         embedding_size, hidden_dim)
    packed = pack_params(params, embedding_size, num_genres)

    movie_id = jax.random.randint(km, (batch,), 0, num_movies, jnp.int32)
    user_id = jax.random.randint(ku, (batch,), 0, num_users, jnp.int32)
    genre_id = jax.random.bernoulli(
        kg, 0.3, (batch, num_genres)).astype(jnp.float32)

    out = jax.block_until_ready(
        movielens_forward(packed, movie_id, user_id, genre_id))
    ref = jax.block_until_ready(
        movielens_forward_ref(params, movie_id, user_id, genre_id))

    assert out.shape == (batch, 1), out.shape
    np.testing.assert_allclose(np.asarray(out), np.asarray(ref),
                               rtol=2e-5, atol=2e-5)
    print("KERNEL_OK")
</pallas_src>

<mosaic_0001>
module attributes {stable_mosaic.version = 11 : i64} {
  func.func @_mlp_fused_kernel(%arg0: i32, %arg1: memref<8xi32, #tpu.memory_space<smem>>, %arg2: memref<8xi32, #tpu.memory_space<smem>>, %arg3: memref<104x128xf32, #tpu.memory_space<vmem>>, %arg4: memref<56x128xf32, #tpu.memory_space<vmem>>, %arg5: memref<8x128xf32, #tpu.memory_space<vmem>>, %arg6: memref<128x128xf32, #tpu.memory_space<vmem>>, %arg7: memref<128x128xf32, #tpu.memory_space<vmem>>, %arg8: memref<128x128xf32, #tpu.memory_space<vmem>>, %arg9: memref<1x128xf32, #tpu.memory_space<vmem>>, %arg10: memref<128x128xf32, #tpu.memory_space<vmem>>, %arg11: memref<1x128xf32, #tpu.memory_space<vmem>>, %arg12: memref<128x128xf32, #tpu.memory_space<vmem>>, %arg13: memref<1x128xf32, #tpu.memory_space<vmem>>, %arg14: memref<8x128xf32, #tpu.memory_space<vmem>>, %arg15: memref<8x128xf32, #tpu.memory_space<vmem>>, %arg16: memref<8x128xf32, #tpu.memory_space<vmem>>) attributes {dimension_semantics = [#tpu.dimension_semantics<parallel>], iteration_bounds = array<i64: 1>, scalar_prefetch = 2 : i64, scratch_operands = 2 : i64, tpu.core_type = #tpu.core_type<tc>, window_params = [{pipeline_mode = #tpu.pipeline_mode<synchronous>, transform_indices = @transform_0, window_bounds = array<i64: 104, 128>}, {pipeline_mode = #tpu.pipeline_mode<synchronous>, transform_indices = @transform_1, window_bounds = array<i64: 56, 128>}, {transform_indices = @transform_2, window_bounds = array<i64: 8, 128>}, {pipeline_mode = #tpu.pipeline_mode<synchronous>, transform_indices = @transform_3, window_bounds = array<i64: 128, 128>}, {pipeline_mode = #tpu.pipeline_mode<synchronous>, transform_indices = @transform_4, window_bounds = array<i64: 128, 128>}, {pipeline_mode = #tpu.pipeline_mode<synchronous>, transform_indices = @transform_5, window_bounds = array<i64: 128, 128>}, {pipeline_mode = #tpu.pipeline_mode<synchronous>, transform_indices = @transform_6, window_bounds = array<i64: 1, 128>}, {pipeline_mode = #tpu.pipeline_mode<synchronous>, transform_indices = @transform_7, window_bounds = array<i64: 128, 128>}, {pipeline_mode = #tpu.pipeline_mode<synchronous>, transform_indices = @transform_8, window_bounds = array<i64: 1, 128>}, {pipeline_mode = #tpu.pipeline_mode<synchronous>, transform_indices = @transform_9, window_bounds = array<i64: 128, 128>}, {pipeline_mode = #tpu.pipeline_mode<synchronous>, transform_indices = @transform_10, window_bounds = array<i64: 1, 128>}, {transform_indices = @transform_11, window_bounds = array<i64: 8, 128>}]} {
    %c8_i32 = arith.constant 8 : i32
    %0 = arith.muli %arg0, %c8_i32 : i32
    %c0_i32 = arith.constant 0 : i32
    %1 = arith.addi %0, %c0_i32 : i32
    %2 = arith.index_cast %1 : i32 to index
    %3 = memref.load %arg1[%2] : memref<8xi32, #tpu.memory_space<smem>>
    %4 = arith.addi %0, %c0_i32 : i32
    %5 = arith.index_cast %4 : i32 to index
    %6 = memref.load %arg2[%5] : memref<8xi32, #tpu.memory_space<smem>>
    %7 = arith.index_cast %3 : i32 to index
    %c0 = arith.constant 0 : index
    %8 = vector.load %arg3[%7, %c0] : memref<104x128xf32, #tpu.memory_space<vmem>>, vector<1x128xf32>
    %9 = arith.index_cast %c0_i32 : i32 to index
    %c0_0 = arith.constant 0 : index
    %10 = vector.load %arg15[%9, %c0_0] : memref<8x128xf32, #tpu.memory_space<vmem>>, vector<1x128xf32>
    tpu.vector_store %arg15[%9, %c0_0], %8 {strides = array<i32>} : memref<8x128xf32, #tpu.memory_space<vmem>>, vector<1x128xf32>,
    %11 = arith.index_cast %6 : i32 to index
    %c0_1 = arith.constant 0 : index
    %12 = vector.load %arg4[%11, %c0_1] : memref<56x128xf32, #tpu.memory_space<vmem>>, vector<1x128xf32>
    %13 = arith.index_cast %c0_i32 : i32 to index
    %c0_2 = arith.constant 0 : index
    %14 = vector.load %arg16[%13, %c0_2] : memref<8x128xf32, #tpu.memory_space<vmem>>, vector<1x128xf32>
    tpu.vector_store %arg16[%13, %c0_2], %12 {strides = array<i32>} : memref<8x128xf32, #tpu.memory_space<vmem>>, vector<1x128xf32>,
    %c1_i32 = arith.constant 1 : i32
    %15 = arith.addi %0, %c1_i32 : i32
    %16 = arith.index_cast %15 : i32 to index
    %17 = memref.load %arg1[%16] : memref<8xi32, #tpu.memory_space<smem>>
    %18 = arith.addi %0, %c1_i32 : i32
    %19 = arith.index_cast %18 : i32 to index
    %20 = memref.load %arg2[%19] : memref<8xi32, #tpu.memory_space<smem>>
    %21 = arith.index_cast %17 : i32 to index
    %c0_3 = arith.constant 0 : index
    %22 = vector.load %arg3[%21, %c0_3] : memref<104x128xf32, #tpu.memory_space<vmem>>, vector<1x128xf32>
    %23 = arith.index_cast %c1_i32 : i32 to index
    %c0_4 = arith.constant 0 : index
    %24 = vector.load %arg15[%23, %c0_4] : memref<8x128xf32, #tpu.memory_space<vmem>>, vector<1x128xf32>
    tpu.vector_store %arg15[%23, %c0_4], %22 {strides = array<i32>} : memref<8x128xf32, #tpu.memory_space<vmem>>, vector<1x128xf32>,
    %25 = arith.index_cast %20 : i32 to index
    %c0_5 = arith.constant 0 : index
    %26 = vector.load %arg4[%25, %c0_5] : memref<56x128xf32, #tpu.memory_space<vmem>>, vector<1x128xf32>
    %27 = arith.index_cast %c1_i32 : i32 to index
    %c0_6 = arith.constant 0 : index
    %28 = vector.load %arg16[%27, %c0_6] : memref<8x128xf32, #tpu.memory_space<vmem>>, vector<1x128xf32>
    tpu.vector_store %arg16[%27, %c0_6], %26 {strides = array<i32>} : memref<8x128xf32, #tpu.memory_space<vmem>>, vector<1x128xf32>,
    %c2_i32 = arith.constant 2 : i32
    %29 = arith.addi %0, %c2_i32 : i32
    %30 = arith.index_cast %29 : i32 to index
    %31 = memref.load %arg1[%30] : memref<8xi32, #tpu.memory_space<smem>>
    %32 = arith.addi %0, %c2_i32 : i32
    %33 = arith.index_cast %32 : i32 to index
    %34 = memref.load %arg2[%33] : memref<8xi32, #tpu.memory_space<smem>>
    %35 = arith.index_cast %31 : i32 to index
    %c0_7 = arith.constant 0 : index
    %36 = vector.load %arg3[%35, %c0_7] : memref<104x128xf32, #tpu.memory_space<vmem>>, vector<1x128xf32>
    %37 = arith.index_cast %c2_i32 : i32 to index
    %c0_8 = arith.constant 0 : index
    %38 = vector.load %arg15[%37, %c0_8] : memref<8x128xf32, #tpu.memory_space<vmem>>, vector<1x128xf32>
    tpu.vector_store %arg15[%37, %c0_8], %36 {strides = array<i32>} : memref<8x128xf32, #tpu.memory_space<vmem>>, vector<1x128xf32>,
    %39 = arith.index_cast %34 : i32 to index
    %c0_9 = arith.constant 0 : index
    %40 = vector.load %arg4[%39, %c0_9] : memref<56x128xf32, #tpu.memory_space<vmem>>, vector<1x128xf32>
    %41 = arith.index_cast %c2_i32 : i32 to index
    %c0_10 = arith.constant 0 : index
    %42 = vector.load %arg16[%41, %c0_10] : memref<8x128xf32, #tpu.memory_space<vmem>>, vector<1x128xf32>
    tpu.vector_store %arg16[%41, %c0_10], %40 {strides = array<i32>} : memref<8x128xf32, #tpu.memory_space<vmem>>, vector<1x128xf32>,
    %c3_i32 = arith.constant 3 : i32
    %43 = arith.addi %0, %c3_i32 : i32
    %44 = arith.index_cast %43 : i32 to index
    %45 = memref.load %arg1[%44] : memref<8xi32, #tpu.memory_space<smem>>
    %46 = arith.addi %0, %c3_i32 : i32
    %47 = arith.index_cast %46 : i32 to index
    %48 = memref.load %arg2[%47] : memref<8xi32, #tpu.memory_space<smem>>
    %49 = arith.index_cast %45 : i32 to index
    %c0_11 = arith.constant 0 : index
    %50 = vector.load %arg3[%49, %c0_11] : memref<104x128xf32, #tpu.memory_space<vmem>>, vector<1x128xf32>
    %51 = arith.index_cast %c3_i32 : i32 to index
    %c0_12 = arith.constant 0 : index
    %52 = vector.load %arg15[%51, %c0_12] : memref<8x128xf32, #tpu.memory_space<vmem>>, vector<1x128xf32>
    tpu.vector_store %arg15[%51, %c0_12], %50 {strides = array<i32>} : memref<8x128xf32, #tpu.memory_space<vmem>>, vector<1x128xf32>,
    %53 = arith.index_cast %48 : i32 to index
    %c0_13 = arith.constant 0 : index
    %54 = vector.load %arg4[%53, %c0_13] : memref<56x128xf32, #tpu.memory_space<vmem>>, vector<1x128xf32>
    %55 = arith.index_cast %c3_i32 : i32 to index
    %c0_14 = arith.constant 0 : index
    %56 = vector.load %arg16[%55, %c0_14] : memref<8x128xf32, #tpu.memory_space<vmem>>, vector<1x128xf32>
    tpu.vector_store %arg16[%55, %c0_14], %54 {strides = array<i32>} : memref<8x128xf32, #tpu.memory_space<vmem>>, vector<1x128xf32>,
    %c4_i32 = arith.constant 4 : i32
    %57 = arith.addi %0, %c4_i32 : i32
    %58 = arith.index_cast %57 : i32 to index
    %59 = memref.load %arg1[%58] : memref<8xi32, #tpu.memory_space<smem>>
    %60 = arith.addi %0, %c4_i32 : i32
    %61 = arith.index_cast %60 : i32 to index
    %62 = memref.load %arg2[%61] : memref<8xi32, #tpu.memory_space<smem>>
    %63 = arith.index_cast %59 : i32 to index
    %c0_15 = arith.constant 0 : index
    %64 = vector.load %arg3[%63, %c0_15] : memref<104x128xf32, #tpu.memory_space<vmem>>, vector<1x128xf32>
    %65 = arith.index_cast %c4_i32 : i32 to index
    %c0_16 = arith.constant 0 : index
    %66 = vector.load %arg15[%65, %c0_16] : memref<8x128xf32, #tpu.memory_space<vmem>>, vector<1x128xf32>
    tpu.vector_store %arg15[%65, %c0_16], %64 {strides = array<i32>} : memref<8x128xf32, #tpu.memory_space<vmem>>, vector<1x128xf32>,
    %67 = arith.index_cast %62 : i32 to index
    %c0_17 = arith.constant 0 : index
    %68 = vector.load %arg4[%67, %c0_17] : memref<56x128xf32, #tpu.memory_space<vmem>>, vector<1x128xf32>
    %69 = arith.index_cast %c4_i32 : i32 to index
    %c0_18 = arith.constant 0 : index
    %70 = vector.load %arg16[%69, %c0_18] : memref<8x128xf32, #tpu.memory_space<vmem>>, vector<1x128xf32>
    tpu.vector_store %arg16[%69, %c0_18], %68 {strides = array<i32>} : memref<8x128xf32, #tpu.memory_space<vmem>>, vector<1x128xf32>,
    %c5_i32 = arith.constant 5 : i32
    %71 = arith.addi %0, %c5_i32 : i32
    %72 = arith.index_cast %71 : i32 to index
    %73 = memref.load %arg1[%72] : memref<8xi32, #tpu.memory_space<smem>>
    %74 = arith.addi %0, %c5_i32 : i32
    %75 = arith.index_cast %74 : i32 to index
    %76 = memref.load %arg2[%75] : memref<8xi32, #tpu.memory_space<smem>>
    %77 = arith.index_cast %73 : i32 to index
    %c0_19 = arith.constant 0 : index
    %78 = vector.load %arg3[%77, %c0_19] : memref<104x128xf32, #tpu.memory_space<vmem>>, vector<1x128xf32>
    %79 = arith.index_cast %c5_i32 : i32 to index
    %c0_20 = arith.constant 0 : index
    %80 = vector.load %arg15[%79, %c0_20] : memref<8x128xf32, #tpu.memory_space<vmem>>, vector<1x128xf32>
    tpu.vector_store %arg15[%79, %c0_20], %78 {strides = array<i32>} : memref<8x128xf32, #tpu.memory_space<vmem>>, vector<1x128xf32>,
    %81 = arith.index_cast %76 : i32 to index
    %c0_21 = arith.constant 0 : index
    %82 = vector.load %arg4[%81, %c0_21] : memref<56x128xf32, #tpu.memory_space<vmem>>, vector<1x128xf32>
    %83 = arith.index_cast %c5_i32 : i32 to index
    %c0_22 = arith.constant 0 : index
    %84 = vector.load %arg16[%83, %c0_22] : memref<8x128xf32, #tpu.memory_space<vmem>>, vector<1x128xf32>
    tpu.vector_store %arg16[%83, %c0_22], %82 {strides = array<i32>} : memref<8x128xf32, #tpu.memory_space<vmem>>, vector<1x128xf32>,
    %c6_i32 = arith.constant 6 : i32
    %85 = arith.addi %0, %c6_i32 : i32
    %86 = arith.index_cast %85 : i32 to index
    %87 = memref.load %arg1[%86] : memref<8xi32, #tpu.memory_space<smem>>
    %88 = arith.addi %0, %c6_i32 : i32
    %89 = arith.index_cast %88 : i32 to index
    %90 = memref.load %arg2[%89] : memref<8xi32, #tpu.memory_space<smem>>
    %91 = arith.index_cast %87 : i32 to index
    %c0_23 = arith.constant 0 : index
    %92 = vector.load %arg3[%91, %c0_23] : memref<104x128xf32, #tpu.memory_space<vmem>>, vector<1x128xf32>
    %93 = arith.index_cast %c6_i32 : i32 to index
    %c0_24 = arith.constant 0 : index
    %94 = vector.load %arg15[%93, %c0_24] : memref<8x128xf32, #tpu.memory_space<vmem>>, vector<1x128xf32>
    tpu.vector_store %arg15[%93, %c0_24], %92 {strides = array<i32>} : memref<8x128xf32, #tpu.memory_space<vmem>>, vector<1x128xf32>,
    %95 = arith.index_cast %90 : i32 to index
    %c0_25 = arith.constant 0 : index
    %96 = vector.load %arg4[%95, %c0_25] : memref<56x128xf32, #tpu.memory_space<vmem>>, vector<1x128xf32>
    %97 = arith.index_cast %c6_i32 : i32 to index
    %c0_26 = arith.constant 0 : index
    %98 = vector.load %arg16[%97, %c0_26] : memref<8x128xf32, #tpu.memory_space<vmem>>, vector<1x128xf32>
    tpu.vector_store %arg16[%97, %c0_26], %96 {strides = array<i32>} : memref<8x128xf32, #tpu.memory_space<vmem>>, vector<1x128xf32>,
    %c7_i32 = arith.constant 7 : i32
    %99 = arith.addi %0, %c7_i32 : i32
    %100 = arith.index_cast %99 : i32 to index
    %101 = memref.load %arg1[%100] : memref<8xi32, #tpu.memory_space<smem>>
    %102 = arith.addi %0, %c7_i32 : i32
    %103 = arith.index_cast %102 : i32 to index
    %104 = memref.load %arg2[%103] : memref<8xi32, #tpu.memory_space<smem>>
    %105 = arith.index_cast %101 : i32 to index
    %c0_27 = arith.constant 0 : index
    %106 = vector.load %arg3[%105, %c0_27] : memref<104x128xf32, #tpu.memory_space<vmem>>, vector<1x128xf32>
    %107 = arith.index_cast %c7_i32 : i32 to index
    %c0_28 = arith.constant 0 : index
    %108 = vector.load %arg15[%107, %c0_28] : memref<8x128xf32, #tpu.memory_space<vmem>>, vector<1x128xf32>
    tpu.vector_store %arg15[%107, %c0_28], %106 {strides = array<i32>} : memref<8x128xf32, #tpu.memory_space<vmem>>, vector<1x128xf32>,
    %109 = arith.index_cast %104 : i32 to index
    %c0_29 = arith.constant 0 : index
    %110 = vector.load %arg4[%109, %c0_29] : memref<56x128xf32, #tpu.memory_space<vmem>>, vector<1x128xf32>
    %111 = arith.index_cast %c7_i32 : i32 to index
    %c0_30 = arith.constant 0 : index
    %112 = vector.load %arg16[%111, %c0_30] : memref<8x128xf32, #tpu.memory_space<vmem>>, vector<1x128xf32>
    tpu.vector_store %arg16[%111, %c0_30], %110 {strides = array<i32>} : memref<8x128xf32, #tpu.memory_space<vmem>>, vector<1x128xf32>,
    %c8_i32_31 = arith.constant 8 : i32
    %c0_32 = arith.constant 0 : index
    %c0_33 = arith.constant 0 : index
    %113 = vector.load %arg15[%c0_32, %c0_33] : memref<8x128xf32, #tpu.memory_space<vmem>>, vector<8x128xf32>
    %c0_34 = arith.constant 0 : index
    %c0_35 = arith.constant 0 : index
    %114 = vector.load %arg6[%c0_34, %c0_35] : memref<128x128xf32, #tpu.memory_space<vmem>>, vector<128x128xf32>
    %cst = arith.constant dense<0.000000e+00> : vector<8x128xf32>
    %115 = tpu.matmul %113, %114, %cst {dimension_numbers = #tpu.dot_dimension_numbers<[1], [0], [0], [1], [0, 0, 1, 1], [], []>} : vector<8x128xf32>, vector<128x128xf32>, vector<8x128xf32> -> vector<8x128xf32>
    %c0_36 = arith.constant 0 : index
    %c0_37 = arith.constant 0 : index
    %116 = vector.load %arg16[%c0_36, %c0_37] : memref<8x128xf32, #tpu.memory_space<vmem>>, vector<8x128xf32>
    %c0_38 = arith.constant 0 : index
    %c0_39 = arith.constant 0 : index
    %117 = vector.load %arg7[%c0_38, %c0_39] : memref<128x128xf32, #tpu.memory_space<vmem>>, vector<128x128xf32>
    %cst_40 = arith.constant dense<0.000000e+00> : vector<8x128xf32>
    %118 = tpu.matmul %116, %117, %cst_40 {dimension_numbers = #tpu.dot_dimension_numbers<[1], [0], [0], [1], [0, 0, 1, 1], [], []>} : vector<8x128xf32>, vector<128x128xf32>, vector<8x128xf32> -> vector<8x128xf32>
    %119 = arith.addf %115, %118 : vector<8x128xf32>
    %c0_41 = arith.constant 0 : index
    %c0_42 = arith.constant 0 : index
    %120 = vector.load %arg5[%c0_41, %c0_42] : memref<8x128xf32, #tpu.memory_space<vmem>>, vector<8x128xf32>
    %c0_43 = arith.constant 0 : index
    %c0_44 = arith.constant 0 : index
    %121 = vector.load %arg8[%c0_43, %c0_44] : memref<128x128xf32, #tpu.memory_space<vmem>>, vector<128x128xf32>
    %cst_45 = arith.constant dense<0.000000e+00> : vector<8x128xf32>
    %122 = tpu.matmul %120, %121, %cst_45 {dimension_numbers = #tpu.dot_dimension_numbers<[1], [0], [0], [1], [0, 0, 1, 1], [], []>} : vector<8x128xf32>, vector<128x128xf32>, vector<8x128xf32> -> vector<8x128xf32>
    %123 = arith.addf %119, %122 : vector<8x128xf32>
    %c0_46 = arith.constant 0 : index
    %c0_47 = arith.constant 0 : index
    %124 = vector.load %arg9[%c0_46, %c0_47] : memref<1x128xf32, #tpu.memory_space<vmem>>, vector<1x128xf32>
    %125 = vector.broadcast %124 : vector<1x128xf32> to vector<8x128xf32>
    %126 = arith.addf %123, %125 : vector<8x128xf32>
    %cst_48 = arith.constant 0.000000e+00 : f32
    %127 = vector.broadcast %cst_48 : f32 to vector<8x128xf32>
    %128 = arith.maximumf %126, %127 : vector<8x128xf32>
    %c0_49 = arith.constant 0 : index
    %c0_50 = arith.constant 0 : index
    %129 = vector.load %arg10[%c0_49, %c0_50] : memref<128x128xf32, #tpu.memory_space<vmem>>, vector<128x128xf32>
    %cst_51 = arith.constant dense<0.000000e+00> : vector<8x128xf32>
    %130 = tpu.matmul %128, %129, %cst_51 {dimension_numbers = #tpu.dot_dimension_numbers<[1], [0], [0], [1], [0, 0, 1, 1], [], []>} : vector<8x128xf32>, vector<128x128xf32>, vector<8x128xf32> -> vector<8x128xf32>
    %c0_52 = arith.constant 0 : index
    %c0_53 = arith.constant 0 : index
    %131 = vector.load %arg11[%c0_52, %c0_53] : memref<1x128xf32, #tpu.memory_space<vmem>>, vector<1x128xf32>
    %132 = vector.broadcast %131 : vector<1x128xf32> to vector<8x128xf32>
    %133 = arith.addf %130, %132 : vector<8x128xf32>
    %cst_54 = arith.constant 0.000000e+00 : f32
    %134 = vector.broadcast %cst_54 : f32 to vector<8x128xf32>
    %135 = arith.maximumf %133, %134 : vector<8x128xf32>
    %c0_55 = arith.constant 0 : index
    %c0_56 = arith.constant 0 : index
    %136 = vector.load %arg12[%c0_55, %c0_56] : memref<128x128xf32, #tpu.memory_space<vmem>>, vector<128x128xf32>
    %cst_57 = arith.constant dense<0.000000e+00> : vector<8x128xf32>
    %137 = tpu.matmul %135, %136, %cst_57 {dimension_numbers = #tpu.dot_dimension_numbers<[1], [0], [0], [1], [0, 0, 1, 1], [], []>} : vector<8x128xf32>, vector<128x128xf32>, vector<8x128xf32> -> vector<8x128xf32>
    %c0_58 = arith.constant 0 : index
    %c0_59 = arith.constant 0 : index
    %138 = vector.load %arg13[%c0_58, %c0_59] : memref<1x128xf32, #tpu.memory_space<vmem>>, vector<1x128xf32>
    %139 = vector.broadcast %138 : vector<1x128xf32> to vector<8x128xf32>
    %140 = arith.addf %137, %139 : vector<8x128xf32>
    %c0_60 = arith.constant 0 : index
    %c0_61 = arith.constant 0 : index
    %141 = vector.load %arg14[%c0_60, %c0_61] : memref<8x128xf32, #tpu.memory_space<vmem>>, vector<8x128xf32>
    tpu.vector_store %arg14[%c0_60, %c0_61], %140 {strides = array<i32>} : memref<8x128xf32, #tpu.memory_space<vmem>>, vector<8x128xf32>,
    return
  }
  func.func @transform_0(%arg0: i32, %arg1: memref<8xi32, #tpu.memory_space<smem>>, %arg2: memref<8xi32, #tpu.memory_space<smem>>) -> (i32, i32) {
    %c0_i32 = arith.constant 0 : i32
    %c0_i32_0 = arith.constant 0 : i32
    %c0_i32_1 = arith.constant 0 : i32
    return %c0_i32, %c0_i32_0 : i32, i32
  }
  func.func @transform_1(%arg0: i32, %arg1: memref<8xi32, #tpu.memory_space<smem>>, %arg2: memref<8xi32, #tpu.memory_space<smem>>) -> (i32, i32) {
    %c0_i32 = arith.constant 0 : i32
    %c0_i32_0 = arith.constant 0 : i32
    %c0_i32_1 = arith.constant 0 : i32
    return %c0_i32, %c0_i32_0 : i32, i32
  }
  func.func @transform_2(%arg0: i32, %arg1: memref<8xi32, #tpu.memory_space<smem>>, %arg2: memref<8xi32, #tpu.memory_space<smem>>) -> (i32, i32) {
    %c0_i32 = arith.constant 0 : i32
    %c0_i32_0 = arith.constant 0 : i32
    return %arg0, %c0_i32 : i32, i32
  }
  func.func @transform_3(%arg0: i32, %arg1: memref<8xi32, #tpu.memory_space<smem>>, %arg2: memref<8xi32, #tpu.memory_space<smem>>) -> (i32, i32) {
    %c0_i32 = arith.constant 0 : i32
    %c0_i32_0 = arith.constant 0 : i32
    %c0_i32_1 = arith.constant 0 : i32
    return %c0_i32, %c0_i32_0 : i32, i32
  }
  func.func @transform_4(%arg0: i32, %arg1: memref<8xi32, #tpu.memory_space<smem>>, %arg2: memref<8xi32, #tpu.memory_space<smem>>) -> (i32, i32) {
    %c0_i32 = arith.constant 0 : i32
    %c0_i32_0 = arith.constant 0 : i32
    %c0_i32_1 = arith.constant 0 : i32
    return %c0_i32, %c0_i32_0 : i32, i32
  }
  func.func @transform_5(%arg0: i32, %arg1: memref<8xi32, #tpu.memory_space<smem>>, %arg2: memref<8xi32, #tpu.memory_space<smem>>) -> (i32, i32) {
    %c0_i32 = arith.constant 0 : i32
    %c0_i32_0 = arith.constant 0 : i32
    %c0_i32_1 = arith.constant 0 : i32
    return %c0_i32, %c0_i32_0 : i32, i32
  }
  func.func @transform_6(%arg0: i32, %arg1: memref<8xi32, #tpu.memory_space<smem>>, %arg2: memref<8xi32, #tpu.memory_space<smem>>) -> (i32, i32) {
    %c0_i32 = arith.constant 0 : i32
    %c0_i32_0 = arith.constant 0 : i32
    %c0_i32_1 = arith.constant 0 : i32
    return %c0_i32, %c0_i32_0 : i32, i32
  }
  func.func @transform_7(%arg0: i32, %arg1: memref<8xi32, #tpu.memory_space<smem>>, %arg2: memref<8xi32, #tpu.memory_space<smem>>) -> (i32, i32) {
    %c0_i32 = arith.constant 0 : i32
    %c0_i32_0 = arith.constant 0 : i32
    %c0_i32_1 = arith.constant 0 : i32
    return %c0_i32, %c0_i32_0 : i32, i32
  }
  func.func @transform_8(%arg0: i32, %arg1: memref<8xi32, #tpu.memory_space<smem>>, %arg2: memref<8xi32, #tpu.memory_space<smem>>) -> (i32, i32) {
    %c0_i32 = arith.constant 0 : i32
    %c0_i32_0 = arith.constant 0 : i32
    %c0_i32_1 = arith.constant 0 : i32
    return %c0_i32, %c0_i32_0 : i32, i32
  }
  func.func @transform_9(%arg0: i32, %arg1: memref<8xi32, #tpu.memory_space<smem>>, %arg2: memref<8xi32, #tpu.memory_space<smem>>) -> (i32, i32) {
    %c0_i32 = arith.constant 0 : i32
    %c0_i32_0 = arith.constant 0 : i32
    %c0_i32_1 = arith.constant 0 : i32
    return %c0_i32, %c0_i32_0 : i32, i32
  }
  func.func @transform_10(%arg0: i32, %arg1: memref<8xi32, #tpu.memory_space<smem>>, %arg2: memref<8xi32, #tpu.memory_space<smem>>) -> (i32, i32) {
    %c0_i32 = arith.constant 0 : i32
    %c0_i32_0 = arith.constant 0 : i32
    %c0_i32_1 = arith.constant 0 : i32
    return %c0_i32, %c0_i32_0 : i32, i32
  }
  func.func @transform_11(%arg0: i32, %arg1: memref<8xi32, #tpu.memory_space<smem>>, %arg2: memref<8xi32, #tpu.memory_space<smem>>) -> (i32, i32) {
    %c0_i32 = arith.constant 0 : i32
    %c0_i32_0 = arith.constant 0 : i32
    return %arg0, %c0_i32 : i32, i32
  }
}

</mosaic_0001>

<llo_original>
// kernel: movielens_forward.1
$region0: #{movielens_forward.1}
  #allocation0 [shape = 'u32[]', space=smem, size = 0x4, offset = 0x4, fixed_abs, tag = 'smem constant byte address 0x4 - core index']
  #allocation1 [shape = 'u32[144,128]{1,0:T(1,128)}', space=vmem, size = 0x12000, scoped, tag = 'internal scratch']
  #allocation2 [shape = 'f32[8,128]{1,0:T(8,128)}', space=vmem, size = 0x1000, scoped, tag = 'scratch operand']
  #allocation3 [shape = 'f32[8,128]{1,0:T(8,128)}', space=vmem, size = 0x1000, scoped, tag = 'scratch operand']
  #allocation4 [shape = 's32[1]{0}', space=sflag, size = 0x4, scoped, tag = 'scoped memory for movielens_forward.1']
  #allocation5 [shape = 'u8[512]{0}', space=smem, size = 0x200, scoped, tag = 'prefetched SMEM operand 0']
  #allocation6 [shape = 'u8[512]{0}', space=smem, size = 0x200, scoped, tag = 'prefetched SMEM operand 1']
  %s0 = inlined_call_operand.vmem [shape: s32[8], index: 0, kind: input, shape index: {}]
  %s1 = inlined_call_operand.vmem [shape: s32[8], index: 1, kind: input, shape index: {}]
  %s2 = inlined_call_operand.hbm [shape: f32[104,128], index: 2, kind: input, shape index: {}]
  %s3 = inlined_call_operand.hbm [shape: f32[56,128], index: 3, kind: input, shape index: {}]
  %s4 = inlined_call_operand.vmem [shape: f32[8,128], index: 4, kind: input, shape index: {}]
  %s5 = inlined_call_operand.hbm [shape: f32[128,128], index: 5, kind: input, shape index: {}]
  %s6 = inlined_call_operand.hbm [shape: f32[128,128], index: 6, kind: input, shape index: {}]
  %s7 = inlined_call_operand.hbm [shape: f32[128,128], index: 7, kind: input, shape index: {}]
  %s8 = inlined_call_operand.vmem [shape: f32[1,128], index: 8, kind: input, shape index: {}]
  %s9 = inlined_call_operand.hbm [shape: f32[128,128], index: 9, kind: input, shape index: {}]
  %s10 = inlined_call_operand.vmem [shape: f32[1,128], index: 10, kind: input, shape index: {}]
  %s11 = inlined_call_operand.hbm [shape: f32[128,128], index: 11, kind: input, shape index: {}]
  %s12 = inlined_call_operand.vmem [shape: f32[1,128], index: 12, kind: input, shape index: {}]
  %s13 = inlined_call_operand.vmem [shape: f32[8,128], index: 13, kind: output, shape index: {}]
  %s14 = sld [smem:[#allocation0]]
  $region82: #{movielens_forward.1} parent=0
    _
  %s16 = ssub.s32 1, %s14
  %s17 = scalar_select 0, %s16, %s14
  %s18 = sshll.u32 %s0, 4
  %s19 = int_to_ptr.vmem [resolvable:$true] %s18
  %21 = dma.vmem_to_smem %s19, 16, [#allocation5], [#allocation4]
  %s22 = sshll.u32 %s1, 4
  %s23 = int_to_ptr.vmem [resolvable:$true] %s22
  %25 = dma.vmem_to_smem %s23, 16, [#allocation6], [#allocation4]
  %26 = dma.done [#allocation4], 32
  %27 = sfence
  $region1: #{movielens_forward.1} parent=0
    #allocation7 [shape = 'u8[53248]{0}', space=vmem, size = 0xd000, scoped, tag = 'input window, operand 2, single buffered']
    #allocation8 [shape = 's32[1]{0}', space=sflag, size = 0x4, scoped, tag = 'scoped memory for movielens_forward.1']
    #allocation9 [shape = 'u8[28672]{0}', space=vmem, size = 0x7000, scoped, tag = 'input window, operand 3, single buffered']
    #allocation10 [shape = 's32[1]{0}', space=sflag, size = 0x4, scoped, tag = 'scoped memory for movielens_forward.1']
    #allocation11 [shape = 'u8[65536]{0}', space=vmem, size = 0x10000, scoped, tag = 'input window, operand 5, single buffered']
    #allocation12 [shape = 'u8[65536]{0}', space=vmem, size = 0x10000, scoped, tag = 'input window, operand 6, single buffered']
    #allocation13 [shape = 's32[1]{0}', space=sflag, size = 0x4, scoped, tag = 'scoped memory for movielens_forward.1']
    #allocation14 [shape = 'u8[65536]{0}', space=vmem, size = 0x10000, scoped, tag = 'input window, operand 7, single buffered']
    #allocation15 [shape = 'u8[65536]{0}', space=vmem, size = 0x10000, scoped, tag = 'input window, operand 9, single buffered']
    #allocation16 [shape = 's32[1]{0}', space=sflag, size = 0x4, scoped, tag = 'scoped memory for movielens_forward.1']
    #allocation17 [shape = 'u8[65536]{0}', space=vmem, size = 0x10000, scoped, tag = 'input window, operand 11, single buffered']
    %28 = vsyncpa [#allocation8], 0
    %29 = vsyncpa [#allocation10], 0
    %30 = vsyncpa [#allocation13], 0
    %31 = vsyncpa [#allocation16], 0
    // Predicated region
    $region2: #{movielens_forward.1} parent=1 // pred_check
      _
    $region3: #{movielens_forward.1} parent=1 // pred_check_branch
      %33 = sbr.rel (0) target = $region5
    $region4: #{movielens_forward.1} parent=1 // pred_region
      %s35 = ssub.s32 1664, 1664
      %36 = vsyncadd [#allocation8], %s35
      %s37 = sshll.u32 [#allocation7], 4
      %s38 = int_to_ptr.vmem [resolvable:$true] %s37
      %43 = dma.hbm_to_vmem [thread:$0]  %s2, 1664, %s38, [#allocation8], 128, 128, 8
    $region5: #{movielens_forward.1} parent=1 // pred_fallthru
      _
    // Predicated region
    $region6: #{movielens_forward.1} parent=1 // pred_check
      _
    $region7: #{movielens_forward.1} parent=1 // pred_check_branch
      %45 = sbr.rel (0) target = $region9
    $region8: #{movielens_forward.1} parent=1 // pred_region
      %s47 = ssub.s32 896, 896
      %48 = vsyncadd [#allocation10], %s47
      %s49 = sshll.u32 [#allocation9], 4
      %s50 = int_to_ptr.vmem [resolvable:$true] %s49
      %55 = dma.hbm_to_vmem [thread:$0]  %s3, 896, %s50, [#allocation10], 128, 128, 8
    $region9: #{movielens_forward.1} parent=1 // pred_fallthru
      _
    // Predicated region
    $region10: #{movielens_forward.1} parent=1 // pred_check
      _
    $region11: #{movielens_forward.1} parent=1 // pred_check_branch
      %57 = sbr.rel (0) target = $region13
    $region12: #{movielens_forward.1} parent=1 // pred_region
      _
    $region13: #{movielens_forward.1} parent=1 // pred_fallthru
      _
    // Predicated region
    $region14: #{movielens_forward.1} parent=1 // pred_check
      _
    $region15: #{movielens_forward.1} parent=1 // pred_check_branch
      %59 = sbr.rel (0) target = $region17
    $region16: #{movielens_forward.1} parent=1 // pred_region
      %s61 = ssub.s32 2048, 2048
      %62 = vsyncadd [#allocation10], %s61
      %s63 = sshll.u32 [#allocation11], 4
      %s64 = int_to_ptr.vmem [resolvable:$true] %s63
      %69 = dma.hbm_to_vmem [thread:$0]  %s5, 2048, %s64, [#allocation10], 128, 128, 8
    $region17: #{movielens_forward.1} parent=1 // pred_fallthru
      _
    // Predicated region
    $region18: #{movielens_forward.1} parent=1 // pred_check
      _
    $region19: #{movielens_forward.1} parent=1 // pred_check_branch
      %71 = sbr.rel (0) target = $region21
    $region20: #{movielens_forward.1} parent=1 // pred_region
      %s73 = ssub.s32 2048, 2048
      %74 = vsyncadd [#allocation13], %s73
      %s75 = sshll.u32 [#allocation12], 4
      %s76 = int_to_ptr.vmem [resolvable:$true] %s75
      %81 = dma.hbm_to_vmem [thread:$0]  %s6, 2048, %s76, [#allocation13], 128, 128, 8
    $region21: #{movielens_forward.1} parent=1 // pred_fallthru
      _
    // Predicated region
    $region22: #{movielens_forward.1} parent=1 // pred_check
      _
    $region23: #{movielens_forward.1} parent=1 // pred_check_branch
      %83 = sbr.rel (0) target = $region25
    $region24: #{movielens_forward.1} parent=1 // pred_region
      %s85 = ssub.s32 2048, 2048
      %86 = vsyncadd [#allocation13], %s85
      %s87 = sshll.u32 [#allocation14], 4
      %s88 = int_to_ptr.vmem [resolvable:$true] %s87
      %93 = dma.hbm_to_vmem [thread:$0]  %s7, 2048, %s88, [#allocation13], 128, 128, 8
    $region25: #{movielens_forward.1} parent=1 // pred_fallthru
      _
    // Predicated region
    $region26: #{movielens_forward.1} parent=1 // pred_check
      _
    $region27: #{movielens_forward.1} parent=1 // pred_check_branch
      %95 = sbr.rel (0) target = $region29
    $region28: #{movielens_forward.1} parent=1 // pred_region
      _
    $region29: #{movielens_forward.1} parent=1 // pred_fallthru
      _
    // Predicated region
    $region30: #{movielens_forward.1} parent=1 // pred_check
      _
    $region31: #{movielens_forward.1} parent=1 // pred_check_branch
      %97 = sbr.rel (0) target = $region33
    $region32: #{movielens_forward.1} parent=1 // pred_region
      %s99 = ssub.s32 2048, 2048
      %100 = vsyncadd [#allocation16], %s99
      %s101 = sshll.u32 [#allocation15], 4
      %s102 = int_to_ptr.vmem [resolvable:$true] %s101
      %107 = dma.hbm_to_vmem [thread:$0]  %s9, 2048, %s102, [#allocation16], 128, 128, 8
    $region33: #{movielens_forward.1} parent=1 // pred_fallthru
      _
    // Predicated region
    $region34: #{movielens_forward.1} parent=1 // pred_check
      _
    $region35: #{movielens_forward.1} parent=1 // pred_check_branch
      %109 = sbr.rel (0) target = $region37
    $region36: #{movielens_forward.1} parent=1 // pred_region
      _
    $region37: #{movielens_forward.1} parent=1 // pred_fallthru
      _
    // Predicated region
    $region38: #{movielens_forward.1} parent=1 // pred_check
      _
    $region39: #{movielens_forward.1} parent=1 // pred_check_branch
      %111 = sbr.rel (0) target = $region41
    $region40: #{movielens_forward.1} parent=1 // pred_region
      %s113 = ssub.s32 2048, 2048
      %114 = vsyncadd [#allocation16], %s113
      %s115 = sshll.u32 [#allocation17], 4
      %s116 = int_to_ptr.vmem [resolvable:$true] %s115
      %121 = dma.hbm_to_vmem [thread:$0]  %s11, 2048, %s116, [#allocation16], 128, 128, 8
    $region41: #{movielens_forward.1} parent=1 // pred_fallthru
      _
    // Predicated region
    $region42: #{movielens_forward.1} parent=1 // pred_check
      _
    $region43: #{movielens_forward.1} parent=1 // pred_check_branch
      %123 = sbr.rel (0) target = $region45
    $region44: #{movielens_forward.1} parent=1 // pred_region
      _
    $region45: #{movielens_forward.1} parent=1 // pred_fallthru
      _
    // Predicated region
    $region46: #{movielens_forward.1} parent=1 // pred_check
      _
    $region47: #{movielens_forward.1} parent=1 // pred_check_branch
      %125 = sbr.rel (0) target = $region49
    $region48: #{movielens_forward.1} parent=1 // pred_region
      %126 = dma.done [#allocation8], 1664
    $region49: #{movielens_forward.1} parent=1 // pred_fallthru
      _
    // Predicated region
    $region50: #{movielens_forward.1} parent=1 // pred_check
      _
    $region51: #{movielens_forward.1} parent=1 // pred_check_branch
      %128 = sbr.rel (0) target = $region53
    $region52: #{movielens_forward.1} parent=1 // pred_region
      %129 = dma.done [#allocation10], 896
    $region53: #{movielens_forward.1} parent=1 // pred_fallthru
      _
    // Predicated region
    $region54: #{movielens_forward.1} parent=1 // pred_check
      _
    $region55: #{movielens_forward.1} parent=1 // pred_check_branch
      %131 = sbr.rel (0) target = $region57
    $region56: #{movielens_forward.1} parent=1 // pred_region
      %132 = dma.done [#allocation10], 2048
    $region57: #{movielens_forward.1} parent=1 // pred_fallthru
      _
    // Predicated region
    $region58: #{movielens_forward.1} parent=1 // pred_check
      _
    $region59: #{movielens_forward.1} parent=1 // pred_check_branch
      %134 = sbr.rel (0) target = $region61
    $region60: #{movielens_forward.1} parent=1 // pred_region
      %135 = dma.done [#allocation13], 2048
    $region61: #{movielens_forward.1} parent=1 // pred_fallthru
      _
    // Predicated region
    $region62: #{movielens_forward.1} parent=1 // pred_check
      _
    $region63: #{movielens_forward.1} parent=1 // pred_check_branch
      %137 = sbr.rel (0) target = $region65
    $region64: #{movielens_forward.1} parent=1 // pred_region
      %138 = dma.done [#allocation13], 2048
    $region65: #{movielens_forward.1} parent=1 // pred_fallthru
      _
    // Predicated region
    $region66: #{movielens_forward.1} parent=1 // pred_check
      _
    $region67: #{movielens_forward.1} parent=1 // pred_check_branch
      %140 = sbr.rel (0) target = $region69
    $region68: #{movielens_forward.1} parent=1 // pred_region
      %141 = dma.done [#allocation16], 2048
    $region69: #{movielens_forward.1} parent=1 // pred_fallthru
      _
    // Predicated region
    $region70: #{movielens_forward.1} parent=1 // pred_check
      _
    $region71: #{movielens_forward.1} parent=1 // pred_check_branch
      %143 = sbr.rel (0) target = $region73
    $region72: #{movielens_forward.1} parent=1 // pred_region
      %144 = dma.done [#allocation16], 2048
    $region73: #{movielens_forward.1} parent=1 // pred_fallthru
      _
    %s145 = smul.u32 0, 8
    %s146 = sld [smem:[#allocation5 + %s145]]
    %s147 = sld [smem:[#allocation6 + %s145]]
    %s148 = scalar_lea.vmem [#allocation7], %s146
    %v149 = vld [vmem:[%s148] sm:$0x1]
    %150 = vst [vmem:[#allocation2] sm:$0x1] %v149
    %s151 = scalar_lea.vmem [#allocation9], %s147
    %v152 = vld [vmem:[%s151] sm:$0x1]
    %153 = vst [vmem:[#allocation3] sm:$0x1] %v152
    %s154 = sadd.s32 %s145, 1
    %s155 = sld [smem:[#allocation5 + %s154]]
    %s156 = sld [smem:[#allocation6 + %s154]]
    %s157 = scalar_lea.vmem [#allocation7], %s155
    %v158 = vld [vmem:[%s157] sm:$0x1]
    %159 = vst [vmem:[#allocation2 + $0x1] sm:$0x1] %v158
    %s160 = scalar_lea.vmem [#allocation9], %s156
    %v161 = vld [vmem:[%s160] sm:$0x1]
    %162 = vst [vmem:[#allocation3 + $0x1] sm:$0x1] %v161
    %s163 = sadd.s32 %s145, 2
    %s164 = sld [smem:[#allocation5 + %s163]]
    %s165 = sld [smem:[#allocation6 + %s163]]
    %s166 = scalar_lea.vmem [#allocation7], %s164
    %v167 = vld [vmem:[%s166] sm:$0x1]
    %168 = vst [vmem:[#allocation2 + $0x2] sm:$0x1] %v167
    %s169 = scalar_lea.vmem [#allocation9], %s165
    %v170 = vld [vmem:[%s169] sm:$0x1]
    %171 = vst [vmem:[#allocation3 + $0x2] sm:$0x1] %v170
    %s172 = sadd.s32 %s145, 3
    %s173 = sld [smem:[#allocation5 + %s172]]
    %s174 = sld [smem:[#allocation6 + %s172]]
    %s175 = scalar_lea.vmem [#allocation7], %s173
    %v176 = vld [vmem:[%s175] sm:$0x1]
    %177 = vst [vmem:[#allocation2 + $0x3] sm:$0x1] %v176
    %s178 = scalar_lea.vmem [#allocation9], %s174
    %v179 = vld [vmem:[%s178] sm:$0x1]
    %180 = vst [vmem:[#allocation3 + $0x3] sm:$0x1] %v179
    %s181 = sadd.s32 %s145, 4
    %s182 = sld [smem:[#allocation5 + %s181]]
    %s183 = sld [smem:[#allocation6 + %s181]]
    %s184 = scalar_lea.vmem [#allocation7], %s182
    %v185 = vld [vmem:[%s184] sm:$0x1]
    %186 = vst [vmem:[#allocation2 + $0x4] sm:$0x1] %v185
    %s187 = scalar_lea.vmem [#allocation9], %s183
    %v188 = vld [vmem:[%s187] sm:$0x1]
    %189 = vst [vmem:[#allocation3 + $0x4] sm:$0x1] %v188
    %s190 = sadd.s32 %s145, 5
    %s191 = sld [smem:[#allocation5 + %s190]]
    %s192 = sld [smem:[#allocation6 + %s190]]
    %s193 = scalar_lea.vmem [#allocation7], %s191
    %v194 = vld [vmem:[%s193] sm:$0x1]
    %195 = vst [vmem:[#allocation2 + $0x5] sm:$0x1] %v194
    %s196 = scalar_lea.vmem [#allocation9], %s192
    %v197 = vld [vmem:[%s196] sm:$0x1]
    %198 = vst [vmem:[#allocation3 + $0x5] sm:$0x1] %v197
    %s199 = sadd.s32 %s145, 6
    %s200 = sld [smem:[#allocation5 + %s199]]
    %s201 = sld [smem:[#allocation6 + %s199]]
    %s202 = scalar_lea.vmem [#allocation7], %s200
    %v203 = vld [vmem:[%s202] sm:$0x1]
    %204 = vst [vmem:[#allocation2 + $0x6] sm:$0x1] %v203
    %s205 = scalar_lea.vmem [#allocation9], %s201
    %v206 = vld [vmem:[%s205] sm:$0x1]
    %207 = vst [vmem:[#allocation3 + $0x6] sm:$0x1] %v206
    %s208 = sadd.s32 %s145, 7
    %s209 = sld [smem:[#allocation5 + %s208]]
    %s210 = sld [smem:[#allocation6 + %s208]]
    %s211 = scalar_lea.vmem [#allocation7], %s209
    %v212 = vld [vmem:[%s211] sm:$0x1]
    %213 = vst [vmem:[#allocation2 + $0x7] sm:$0x1] %v212
    %s214 = scalar_lea.vmem [#allocation9], %s210
    %v215 = vld [vmem:[%s214] sm:$0x1]
    %216 = vst [vmem:[#allocation3 + $0x7] sm:$0x1] %v215
    %v217 = vld [vmem:[#allocation2] sm:$0xff]
    %v218 = vld [vmem:[#allocation11] sm:$0xff]
    %v219 = vld [vmem:[#allocation11 + $0x8] sm:$0xff]
    %v220 = vld [vmem:[#allocation11 + $0x10] sm:$0xff]
    %v221 = vld [vmem:[#allocation11 + $0x18] sm:$0xff]
    %v222 = vld [vmem:[#allocation11 + $0x20] sm:$0xff]
    %v223 = vld [vmem:[#allocation11 + $0x28] sm:$0xff]
    %v224 = vld [vmem:[#allocation11 + $0x30] sm:$0xff]
    %v225 = vld [vmem:[#allocation11 + $0x38] sm:$0xff]
    %v226 = vld [vmem:[#allocation11 + $0x40] sm:$0xff]
    %v227 = vld [vmem:[#allocation11 + $0x48] sm:$0xff]
    %v228 = vld [vmem:[#allocation11 + $0x50] sm:$0xff]
    %v229 = vld [vmem:[#allocation11 + $0x58] sm:$0xff]
    %v230 = vld [vmem:[#allocation11 + $0x60] sm:$0xff]
    %v231 = vld [vmem:[#allocation11 + $0x68] sm:$0xff]
    %v232 = vld [vmem:[#allocation11 + $0x70] sm:$0xff]
    %v233 = vld [vmem:[#allocation11 + $0x78] sm:$0xff]
    %v234 = vld [vmem:[#allocation3] sm:$0xff]
    %v235 = vld [vmem:[#allocation12] sm:$0xff]
    %v236 = vld [vmem:[#allocation12 + $0x8] sm:$0xff]
    %v237 = vld [vmem:[#allocation12 + $0x10] sm:$0xff]
    %v238 = vld [vmem:[#allocation12 + $0x18] sm:$0xff]
    %v239 = vld [vmem:[#allocation12 + $0x20] sm:$0xff]
    %v240 = vld [vmem:[#allocation12 + $0x28] sm:$0xff]
    %v241 = vld [vmem:[#allocation12 + $0x30] sm:$0xff]
    %v242 = vld [vmem:[#allocation12 + $0x38] sm:$0xff]
    %v243 = vld [vmem:[#allocation12 + $0x40] sm:$0xff]
    %v244 = vld [vmem:[#allocation12 + $0x48] sm:$0xff]
    %v245 = vld [vmem:[#allocation12 + $0x50] sm:$0xff]
    %v246 = vld [vmem:[#allocation12 + $0x58] sm:$0xff]
    %v247 = vld [vmem:[#allocation12 + $0x60] sm:$0xff]
    %v248 = vld [vmem:[#allocation12 + $0x68] sm:$0xff]
    %v249 = vld [vmem:[#allocation12 + $0x70] sm:$0xff]
    %v250 = vld [vmem:[#allocation12 + $0x78] sm:$0xff]
    %251 = vmatprep.subr.mxu0 0.0
    %252 = vmatpush1.msra.mxu0 %v235
    %253 = vmatprep.subr.mxu0 0.0
    %254 = vmatpush1.msra.mxu0 %v236
    %255 = vmatprep.subr.mxu0 0.0
    %256 = vmatpush1.msra.mxu0 %v237
    %257 = vmatprep.subr.mxu0 0.0
    %258 = vmatpush1.msra.mxu0 %v238
    %259 = vmatprep.subr.mxu0 0.0
    %260 = vmatpush1.msra.mxu0 %v239
    %261 = vmatprep.subr.mxu0 0.0
    %262 = vmatpush1.msra.mxu0 %v240
    %263 = vmatprep.subr.mxu0 0.0
    %264 = vmatpush1.msra.mxu0 %v241
    %265 = vmatprep.subr.mxu0 0.0
    %266 = vmatpush1.msra.mxu0 %v242
    %267 = vmatprep.subr.mxu0 0.0
    %268 = vmatpush1.msra.mxu0 %v243
    %269 = vmatprep.subr.mxu0 0.0
    %270 = vmatpush1.msra.mxu0 %v244
    %271 = vmatprep.subr.mxu0 0.0
    %272 = vmatpush1.msra.mxu0 %v245
    %273 = vmatprep.subr.mxu0 0.0
    %274 = vmatpush1.msra.mxu0 %v246
    %275 = vmatprep.subr.mxu0 0.0
    %276 = vmatpush1.msra.mxu0 %v247
    %277 = vmatprep.subr.mxu0 0.0
    %278 = vmatpush1.msra.mxu0 %v248
    %279 = vmatprep.subr.mxu0 0.0
    %280 = vmatpush1.msra.mxu0 %v249
    %281 = vmatprep.subr.mxu0 0.0
    %282 = vmatpush1.msra.mxu0 %v250
    %283 = vmatprep.subr.mxu0 0.0
    %284 = vmatpush1.msra.mxu0 0.0
    %285 = vmatprep.subr.mxu0 0.0
    %286 = vmatpush1.msra.mxu0 0.0
    %287 = vmatprep.subr.mxu0 0.0
    %288 = vmatpush1.msra.mxu0 0.0
    %289 = vmatprep.subr.mxu0 0.0
    %290 = vmatpush1.msra.mxu0 0.0
    %291 = vmatprep.subr.mxu0 0.0
    %292 = vmatpush1.msra.mxu0 0.0
    %293 = vmatprep.subr.mxu0 0.0
    %294 = vmatpush1.msra.mxu0 0.0
    %295 = vmatprep.subr.mxu0 0.0
    %296 = vmatpush1.msra.mxu0 0.0
    %297 = vmatprep.subr.mxu0 0.0
    %298 = vmatpush1.msra.mxu0 0.0
    %299 = vmatprep.subr.mxu0 0.0
    %300 = vmatpush1.msra.mxu0 0.0
    %301 = vmatprep.subr.mxu0 0.0
    %302 = vmatpush1.msra.mxu0 0.0
    %303 = vmatprep.subr.mxu0 0.0
    %304 = vmatpush1.msra.mxu0 0.0
    %305 = vmatprep.subr.mxu0 0.0
    %306 = vmatpush1.msra.mxu0 0.0
    %307 = vmatprep.subr.mxu0 0.0
    %308 = vmatpush1.msra.mxu0 0.0
    %309 = vmatprep.subr.mxu0 0.0
    %310 = vmatpush1.msra.mxu0 0.0
    %311 = vmatprep.subr.mxu0 0.0
    %312 = vmatpush1.msra.mxu0 0.0
    %313 = vmatprep.subr.mxu0 0.0
    %314 = vmatpush1.msra.mxu0 0.0
    %315 = vmatprep.mubr.f32.mxu0 0.0
    %316 = vmatmul.mubr.f32.gmra.mrb[0].mxu0 %v234
    %v317 = vpop.f32.mrb[0].mxu0
    %v318 = vadd.f32 0.0, %v317
    %v319 = vpop.f32.mrb[0].mxu0
    %320 = vdwg.mxu0
    %321 = vmatprep.subr.mxu0 0.0
    %322 = vmatpush1.msra.mxu0 %v218
    %323 = vmatprep.subr.mxu0 0.0
    %324 = vmatpush1.msra.mxu0 %v219
    %325 = vmatprep.subr.mxu0 0.0
    %326 = vmatpush1.msra.mxu0 %v220
    %327 = vmatprep.subr.mxu0 0.0
    %328 = vmatpush1.msra.mxu0 %v221
    %329 = vmatprep.subr.mxu0 0.0
    %330 = vmatpush1.msra.mxu0 %v222
    %331 = vmatprep.subr.mxu0 0.0
    %332 = vmatpush1.msra.mxu0 %v223
    %333 = vmatprep.subr.mxu0 0.0
    %334 = vmatpush1.msra.mxu0 %v224
    %335 = vmatprep.subr.mxu0 0.0
    %336 = vmatpush1.msra.mxu0 %v225
    %337 = vmatprep.subr.mxu0 0.0
    %338 = vmatpush1.msra.mxu0 %v226
    %339 = vmatprep.subr.mxu0 0.0
    %340 = vmatpush1.msra.mxu0 %v227
    %341 = vmatprep.subr.mxu0 0.0
    %342 = vmatpush1.msra.mxu0 %v228
    %343 = vmatprep.subr.mxu0 0.0
    %344 = vmatpush1.msra.mxu0 %v229
    %345 = vmatprep.subr.mxu0 0.0
    %346 = vmatpush1.msra.mxu0 %v230
    %347 = vmatprep.subr.mxu0 0.0
    %348 = vmatpush1.msra.mxu0 %v231
    %349 = vmatprep.subr.mxu0 0.0
    %350 = vmatpush1.msra.mxu0 %v232
    %351 = vmatprep.subr.mxu0 0.0
    %352 = vmatpush1.msra.mxu0 %v233
    %353 = vmatprep.subr.mxu0 0.0
    %354 = vmatpush1.msra.mxu0 0.0
    %355 = vmatprep.subr.mxu0 0.0
    %356 = vmatpush1.msra.mxu0 0.0
    %357 = vmatprep.subr.mxu0 0.0
    %358 = vmatpush1.msra.mxu0 0.0
    %359 = vmatprep.subr.mxu0 0.0
    %360 = vmatpush1.msra.mxu0 0.0
    %361 = vmatprep.subr.mxu0 0.0
    %362 = vmatpush1.msra.mxu0 0.0
    %363 = vmatprep.subr.mxu0 0.0
    %364 = vmatpush1.msra.mxu0 0.0
    %365 = vmatprep.subr.mxu0 0.0
    %366 = vmatpush1.msra.mxu0 0.0
    %367 = vmatprep.subr.mxu0 0.0
    %368 = vmatpush1.msra.mxu0 0.0
    %369 = vmatprep.subr.mxu0 0.0
    %370 = vmatpush1.msra.mxu0 0.0
    %371 = vmatprep.subr.mxu0 0.0
    %372 = vmatpush1.msra.mxu0 0.0
    %373 = vmatprep.subr.mxu0 0.0
    %374 = vmatpush1.msra.mxu0 0.0
    %375 = vmatprep.subr.mxu0 0.0
    %376 = vmatpush1.msra.mxu0 0.0
    %377 = vmatprep.subr.mxu0 0.0
    %378 = vmatpush1.msra.mxu0 0.0
    %379 = vmatprep.subr.mxu0 0.0
    %380 = vmatpush1.msra.mxu0 0.0
    %381 = vmatprep.subr.mxu0 0.0
    %382 = vmatpush1.msra.mxu0 0.0
    %383 = vmatprep.subr.mxu0 0.0
    %384 = vmatpush1.msra.mxu0 0.0
    %385 = vmatprep.mubr.f32.mxu0 0.0
    %386 = vmatmul.mubr.f32.gmra.mrb[0].mxu0 %v217
    %v387 = vpop.f32.mrb[0].mxu0
    %v388 = vadd.f32 %v318, %v387
    %v389 = vpop.f32.mrb[0].mxu0
    %390 = vdwg.mxu0
    %v391 = vld [vmem:[%s4] sm:$0xff]
    %v392 = vld [vmem:[#allocation14] sm:$0xff]
    %v393 = vld [vmem:[#allocation14 + $0x8] sm:$0xff]
    %v394 = vld [vmem:[#allocation14 + $0x10] sm:$0xff]
    %v395 = vld [vmem:[#allocation14 + $0x18] sm:$0xff]
    %v396 = vld [vmem:[#allocation14 + $0x20] sm:$0xff]
    %v397 = vld [vmem:[#allocation14 + $0x28] sm:$0xff]
    %v398 = vld [vmem:[#allocation14 + $0x30] sm:$0xff]
    %v399 = vld [vmem:[#allocation14 + $0x38] sm:$0xff]
    %v400 = vld [vmem:[#allocation14 + $0x40] sm:$0xff]
    %v401 = vld [vmem:[#allocation14 + $0x48] sm:$0xff]
    %v402 = vld [vmem:[#allocation14 + $0x50] sm:$0xff]
    %v403 = vld [vmem:[#allocation14 + $0x58] sm:$0xff]
    %v404 = vld [vmem:[#allocation14 + $0x60] sm:$0xff]
    %v405 = vld [vmem:[#allocation14 + $0x68] sm:$0xff]
    %v406 = vld [vmem:[#allocation14 + $0x70] sm:$0xff]
    %v407 = vld [vmem:[#allocation14 + $0x78] sm:$0xff]
    %408 = vmatprep.subr.mxu0 0.0
    %409 = vmatpush1.msra.mxu0 %v392
    %410 = vmatprep.subr.mxu0 0.0
    %411 = vmatpush1.msra.mxu0 %v393
    %412 = vmatprep.subr.mxu0 0.0
    %413 = vmatpush1.msra.mxu0 %v394
    %414 = vmatprep.subr.mxu0 0.0
    %415 = vmatpush1.msra.mxu0 %v395
    %416 = vmatprep.subr.mxu0 0.0
    %417 = vmatpush1.msra.mxu0 %v396
    %418 = vmatprep.subr.mxu0 0.0
    %419 = vmatpush1.msra.mxu0 %v397
    %420 = vmatprep.subr.mxu0 0.0
    %421 = vmatpush1.msra.mxu0 %v398
    %422 = vmatprep.subr.mxu0 0.0
    %423 = vmatpush1.msra.mxu0 %v399
    %424 = vmatprep.subr.mxu0 0.0
    %425 = vmatpush1.msra.mxu0 %v400
    %426 = vmatprep.subr.mxu0 0.0
    %427 = vmatpush1.msra.mxu0 %v401
    %428 = vmatprep.subr.mxu0 0.0
    %429 = vmatpush1.msra.mxu0 %v402
    %430 = vmatprep.subr.mxu0 0.0
    %431 = vmatpush1.msra.mxu0 %v403
    %432 = vmatprep.subr.mxu0 0.0
    %433 = vmatpush1.msra.mxu0 %v404
    %434 = vmatprep.subr.mxu0 0.0
    %435 = vmatpush1.msra.mxu0 %v405
    %436 = vmatprep.subr.mxu0 0.0
    %437 = vmatpush1.msra.mxu0 %v406
    %438 = vmatprep.subr.mxu0 0.0
    %439 = vmatpush1.msra.mxu0 %v407
    %440 = vmatprep.subr.mxu0 0.0
    %441 = vmatpush1.msra.mxu0 0.0
    %442 = vmatprep.subr.mxu0 0.0
    %443 = vmatpush1.msra.mxu0 0.0
    %444 = vmatprep.subr.mxu0 0.0
    %445 = vmatpush1.msra.mxu0 0.0
    %446 = vmatprep.subr.mxu0 0.0
    %447 = vmatpush1.msra.mxu0 0.0
    %448 = vmatprep.subr.mxu0 0.0
    %449 = vmatpush1.msra.mxu0 0.0
    %450 = vmatprep.subr.mxu0 0.0
    %451 = vmatpush1.msra.mxu0 0.0
    %452 = vmatprep.subr.mxu0 0.0
    %453 = vmatpush1.msra.mxu0 0.0
    %454 = vmatprep.subr.mxu0 0.0
    %455 = vmatpush1.msra.mxu0 0.0
    %456 = vmatprep.subr.mxu0 0.0
    %457 = vmatpush1.msra.mxu0 0.0
    %458 = vmatprep.subr.mxu0 0.0
    %459 = vmatpush1.msra.mxu0 0.0
    %460 = vmatprep.subr.mxu0 0.0
    %461 = vmatpush1.msra.mxu0 0.0
    %462 = vmatprep.subr.mxu0 0.0
    %463 = vmatpush1.msra.mxu0 0.0
    %464 = vmatprep.subr.mxu0 0.0
    %465 = vmatpush1.msra.mxu0 0.0
    %466 = vmatprep.subr.mxu0 0.0
    %467 = vmatpush1.msra.mxu0 0.0
    %468 = vmatprep.subr.mxu0 0.0
    %469 = vmatpush1.msra.mxu0 0.0
    %470 = vmatprep.subr.mxu0 0.0
    %471 = vmatpush1.msra.mxu0 0.0
    %472 = vmatprep.mubr.f32.mxu0 0.0
    %473 = vmatmul.mubr.f32.gmra.mrb[0].mxu0 %v391
    %v474 = vpop.f32.mrb[0].mxu0
    %v475 = vadd.f32 0.0, %v474
    %v476 = vpop.f32.mrb[0].mxu0
    %477 = vdwg.mxu0
    %v478 = vadd.f32 %v388, %v475
    %v479 = vld [vmem:[%s8] sm:$0x1]
    %v481 = vlaneseq
    %v482 = vshrl.u32 %v481, 7
    %v483 = vsub.s32 0, %v482
    %v484 = vrot.slane %v479, %v483
    %v486 = vadd.f32 %v478, %v484
    %v487 = vmax.f32 %v486, 0.0
    %v488 = vld [vmem:[#allocation15] sm:$0xff]
    %v489 = vld [vmem:[#allocation15 + $0x8] sm:$0xff]
    %v490 = vld [vmem:[#allocation15 + $0x10] sm:$0xff]
    %v491 = vld [vmem:[#allocation15 + $0x18] sm:$0xff]
    %v492 = vld [vmem:[#allocation15 + $0x20] sm:$0xff]
    %v493 = vld [vmem:[#allocation15 + $0x28] sm:$0xff]
    %v494 = vld [vmem:[#allocation15 + $0x30] sm:$0xff]
    %v495 = vld [vmem:[#allocation15 + $0x38] sm:$0xff]
    %v496 = vld [vmem:[#allocation15 + $0x40] sm:$0xff]
    %v497 = vld [vmem:[#allocation15 + $0x48] sm:$0xff]
    %v498 = vld [vmem:[#allocation15 + $0x50] sm:$0xff]
    %v499 = vld [vmem:[#allocation15 + $0x58] sm:$0xff]
    %v500 = vld [vmem:[#allocation15 + $0x60] sm:$0xff]
    %v501 = vld [vmem:[#allocation15 + $0x68] sm:$0xff]
    %v502 = vld [vmem:[#allocation15 + $0x70] sm:$0xff]
    %v503 = vld [vmem:[#allocation15 + $0x78] sm:$0xff]
    %v504 = vld [vmem:[%s10] sm:$0x1]
    %v506 = vlaneseq
    %v507 = vshrl.u32 %v506, 7
    %v508 = vsub.s32 0, %v507
    %v509 = vrot.slane %v504, %v508
    %511 = vmatprep.subr.mxu0 0.0
    %512 = vmatpush1.msra.mxu0 %v488
    %513 = vmatprep.subr.mxu0 0.0
    %514 = vmatpush1.msra.mxu0 %v489
    %515 = vmatprep.subr.mxu0 0.0
    %516 = vmatpush1.msra.mxu0 %v490
    %517 = vmatprep.subr.mxu0 0.0
    %518 = vmatpush1.msra.mxu0 %v491
    %519 = vmatprep.subr.mxu0 0.0
    %520 = vmatpush1.msra.mxu0 %v492
    %521 = vmatprep.subr.mxu0 0.0
    %522 = vmatpush1.msra.mxu0 %v493
    %523 = vmatprep.subr.mxu0 0.0
    %524 = vmatpush1.msra.mxu0 %v494
    %525 = vmatprep.subr.mxu0 0.0
    %526 = vmatpush1.msra.mxu0 %v495
    %527 = vmatprep.subr.mxu0 0.0
    %528 = vmatpush1.msra.mxu0 %v496
    %529 = vmatprep.subr.mxu0 0.0
    %530 = vmatpush1.msra.mxu0 %v497
    %531 = vmatprep.subr.mxu0 0.0
    %532 = vmatpush1.msra.mxu0 %v498
    %533 = vmatprep.subr.mxu0 0.0
    %534 = vmatpush1.msra.mxu0 %v499
    %535 = vmatprep.subr.mxu0 0.0
    %536 = vmatpush1.msra.mxu0 %v500
    %537 = vmatprep.subr.mxu0 0.0
    %538 = vmatpush1.msra.mxu0 %v501
    %539 = vmatprep.subr.mxu0 0.0
    %540 = vmatpush1.msra.mxu0 %v502
    %541 = vmatprep.subr.mxu0 0.0
    %542 = vmatpush1.msra.mxu0 %v503
    %543 = vmatprep.subr.mxu0 0.0
    %544 = vmatpush1.msra.mxu0 0.0
    %545 = vmatprep.subr.mxu0 0.0
    %546 = vmatpush1.msra.mxu0 0.0
    %547 = vmatprep.subr.mxu0 0.0
    %548 = vmatpush1.msra.mxu0 0.0
    %549 = vmatprep.subr.mxu0 0.0
    %550 = vmatpush1.msra.mxu0 0.0
    %551 = vmatprep.subr.mxu0 0.0
    %552 = vmatpush1.msra.mxu0 0.0
    %553 = vmatprep.subr.mxu0 0.0
    %554 = vmatpush1.msra.mxu0 0.0
    %555 = vmatprep.subr.mxu0 0.0
    %556 = vmatpush1.msra.mxu0 0.0
    %557 = vmatprep.subr.mxu0 0.0
    %558 = vmatpush1.msra.mxu0 0.0
    %559 = vmatprep.subr.mxu0 0.0
    %560 = vmatpush1.msra.mxu0 0.0
    %561 = vmatprep.subr.mxu0 0.0
    %562 = vmatpush1.msra.mxu0 0.0
    %563 = vmatprep.subr.mxu0 0.0
    %564 = vmatpush1.msra.mxu0 0.0
    %565 = vmatprep.subr.mxu0 0.0
    %566 = vmatpush1.msra.mxu0 0.0
    %567 = vmatprep.subr.mxu0 0.0
    %568 = vmatpush1.msra.mxu0 0.0
    %569 = vmatprep.subr.mxu0 0.0
    %570 = vmatpush1.msra.mxu0 0.0
    %571 = vmatprep.subr.mxu0 0.0
    %572 = vmatpush1.msra.mxu0 0.0
    %573 = vmatprep.subr.mxu0 0.0
    %574 = vmatpush1.msra.mxu0 0.0
    %575 = vmatprep.mubr.f32.mxu0 0.0
    %576 = vmatmul.mubr.f32.gmra.mrb[0].mxu0 %v487
    %v577 = vpop.f32.mrb[0].mxu0
    %v578 = vadd.f32 %v509, %v577
    %v579 = vpop.f32.mrb[0].mxu0
    %580 = vdwg.mxu0
    %v581 = vmax.f32 %v578, 0.0
    %v582 = vld [vmem:[#allocation17] sm:$0xff]
    %v583 = vld [vmem:[#allocation17 + $0x8] sm:$0xff]
    %v584 = vld [vmem:[#allocation17 + $0x10] sm:$0xff]
    %v585 = vld [vmem:[#allocation17 + $0x18] sm:$0xff]
    %v586 = vld [vmem:[#allocation17 + $0x20] sm:$0xff]
    %v587 = vld [vmem:[#allocation17 + $0x28] sm:$0xff]
    %v588 = vld [vmem:[#allocation17 + $0x30] sm:$0xff]
    %v589 = vld [vmem:[#allocation17 + $0x38] sm:$0xff]
    %v590 = vld [vmem:[#allocation17 + $0x40] sm:$0xff]
    %v591 = vld [vmem:[#allocation17 + $0x48] sm:$0xff]
    %v592 = vld [vmem:[#allocation17 + $0x50] sm:$0xff]
    %v593 = vld [vmem:[#allocation17 + $0x58] sm:$0xff]
    %v594 = vld [vmem:[#allocation17 + $0x60] sm:$0xff]
    %v595 = vld [vmem:[#allocation17 + $0x68] sm:$0xff]
    %v596 = vld [vmem:[#allocation17 + $0x70] sm:$0xff]
    %v597 = vld [vmem:[#allocation17 + $0x78] sm:$0xff]
    %v598 = vld [vmem:[%s12] sm:$0x1]
    %v600 = vlaneseq
    %v601 = vshrl.u32 %v600, 7
    %v602 = vsub.s32 0, %v601
    %v603 = vrot.slane %v598, %v602
    %605 = vmatprep.subr.mxu0 0.0
    %606 = vmatpush1.msra.mxu0 %v582
    %607 = vmatprep.subr.mxu0 0.0
    %608 = vmatpush1.msra.mxu0 %v583
    %609 = vmatprep.subr.mxu0 0.0
    %610 = vmatpush1.msra.mxu0 %v584
    %611 = vmatprep.subr.mxu0 0.0
    %612 = vmatpush1.msra.mxu0 %v585
    %613 = vmatprep.subr.mxu0 0.0
    %614 = vmatpush1.msra.mxu0 %v586
    %615 = vmatprep.subr.mxu0 0.0
    %616 = vmatpush1.msra.mxu0 %v587
    %617 = vmatprep.subr.mxu0 0.0
    %618 = vmatpush1.msra.mxu0 %v588
    %619 = vmatprep.subr.mxu0 0.0
    %620 = vmatpush1.msra.mxu0 %v589
    %621 = vmatprep.subr.mxu0 0.0
    %622 = vmatpush1.msra.mxu0 %v590
    %623 = vmatprep.subr.mxu0 0.0
    %624 = vmatpush1.msra.mxu0 %v591
    %625 = vmatprep.subr.mxu0 0.0
    %626 = vmatpush1.msra.mxu0 %v592
    %627 = vmatprep.subr.mxu0 0.0
    %628 = vmatpush1.msra.mxu0 %v593
    %629 = vmatprep.subr.mxu0 0.0
    %630 = vmatpush1.msra.mxu0 %v594
    %631 = vmatprep.subr.mxu0 0.0
    %632 = vmatpush1.msra.mxu0 %v595
    %633 = vmatprep.subr.mxu0 0.0
    %634 = vmatpush1.msra.mxu0 %v596
    %635 = vmatprep.subr.mxu0 0.0
    %636 = vmatpush1.msra.mxu0 %v597
    %637 = vmatprep.subr.mxu0 0.0
    %638 = vmatpush1.msra.mxu0 0.0
    %639 = vmatprep.subr.mxu0 0.0
    %640 = vmatpush1.msra.mxu0 0.0
    %641 = vmatprep.subr.mxu0 0.0
    %642 = vmatpush1.msra.mxu0 0.0
    %643 = vmatprep.subr.mxu0 0.0
    %644 = vmatpush1.msra.mxu0 0.0
    %645 = vmatprep.subr.mxu0 0.0
    %646 = vmatpush1.msra.mxu0 0.0
    %647 = vmatprep.subr.mxu0 0.0
    %648 = vmatpush1.msra.mxu0 0.0
    %649 = vmatprep.subr.mxu0 0.0
    %650 = vmatpush1.msra.mxu0 0.0
    %651 = vmatprep.subr.mxu0 0.0
    %652 = vmatpush1.msra.mxu0 0.0
    %653 = vmatprep.subr.mxu0 0.0
    %654 = vmatpush1.msra.mxu0 0.0
    %655 = vmatprep.subr.mxu0 0.0
    %656 = vmatpush1.msra.mxu0 0.0
    %657 = vmatprep.subr.mxu0 0.0
    %658 = vmatpush1.msra.mxu0 0.0
    %659 = vmatprep.subr.mxu0 0.0
    %660 = vmatpush1.msra.mxu0 0.0
    %661 = vmatprep.subr.mxu0 0.0
    %662 = vmatpush1.msra.mxu0 0.0
    %663 = vmatprep.subr.mxu0 0.0
    %664 = vmatpush1.msra.mxu0 0.0
    %665 = vmatprep.subr.mxu0 0.0
    %666 = vmatpush1.msra.mxu0 0.0
    %667 = vmatprep.subr.mxu0 0.0
    %668 = vmatpush1.msra.mxu0 0.0
    %669 = vmatprep.mubr.f32.mxu0 0.0
    %670 = vmatmul.mubr.f32.gmra.mrb[0].mxu0 %v581
    %v671 = vpop.f32.mrb[0].mxu0
    %v672 = vadd.f32 %v603, %v671
    %v673 = vpop.f32.mrb[0].mxu0
    %674 = vdwg.mxu0
    %675 = vst [vmem:[%s13] sm:$0xff] %v672
    // Predicated region
    $region74: #{movielens_forward.1} parent=1 // pred_check
      _
    $region75: #{movielens_forward.1} parent=1 // pred_check_branch
      %677 = sbr.rel (0) target = $region77
    $region76: #{movielens_forward.1} parent=1 // pred_region
      _
    $region77: #{movielens_forward.1} parent=1 // pred_fallthru
      _
    // Predicated region
    $region78: #{movielens_forward.1} parent=1 // pred_check
      _
    $region79: #{movielens_forward.1} parent=1 // pred_check_branch
      %679 = sbr.rel (0) target = $region81
    $region80: #{movielens_forward.1} parent=1 // pred_region
      _
    $region81: #{movielens_forward.1} parent=1 // pred_fallthru
      _
    %680 = vsyncpa [#allocation8], 1
    %681 = vsyncpa [#allocation10], 1
    %682 = vsyncpa [#allocation13], 1
    %683 = vsyncpa [#allocation16], 1

</llo_original>
